<compile_context>
chip_gen: v6e
topology: v6e:2x2x1
jax: 0.10.0
libtpu: 0.0.40
codegen_flags: <defaults>
</compile_context>

<pallas_src>
import jax
import jax.numpy as jnp
from jax.experimental import pallas as pl
from jax.experimental.pallas import tpu as pltpu


def _round_up(x, m):
    return ((x + m - 1) // m) * m


# ---------------------------------------------------------------------------
# Kernels
# ---------------------------------------------------------------------------

def _lstm_step_kernel(x_ref, h_ref, c_ref, wih_ref, whh_ref, bg_ref,
                      wlin_ref, blin_ref, out_ref, hs_ref, cs_ref):
    """One LSTMCell step + linear head.  No grid; all operands are full VMEM blocks."""
    H = h_ref.shape[-1]
    hp = wih_ref.shape[-1] // 4          # lane-padded per-gate column block (>=128)
    wd = wih_ref.dtype                   # MXU feed dtype (bf16 by default)

    # Two single-K-tile MXU contractions (K = input_size, K = H; both fit one
    # lane tile, weights have no masked sublane tails) + broadcast f32 bias add.
    gates = (jnp.dot(x_ref[...].astype(wd), wih_ref[...],
                     preferred_element_type=jnp.float32)
             + jnp.dot(h_ref[...].astype(wd), whh_ref[...],
                       preferred_element_type=jnp.float32)
             + bg_ref[...])

    # Gate columns start on 128-lane boundaries -> slices need no lane rotate.
    # Gate order [i, f, g, o] matches PyTorch.
    i = jax.nn.sigmoid(gates[:, 0 * hp:0 * hp + H])
    f = jax.nn.sigmoid(gates[:, 1 * hp:1 * hp + H])
    g = jnp.tanh(gates[:, 2 * hp:2 * hp + H])
    o = jax.nn.sigmoid(gates[:, 3 * hp:3 * hp + H])

    c_new = f * c_ref[...] + i * g                     # f32 elementwise (VPU/EUP)
    h_new = o * jnp.tanh(c_new)

    cs_ref[...] = c_new.astype(cs_ref.dtype)
    hs_ref[...] = h_new.astype(hs_ref.dtype)
    out_ref[...] = (jnp.dot(h_new.astype(wlin_ref.dtype), wlin_ref[...],
                            preferred_element_type=jnp.float32)
                    + blin_ref[...]).astype(out_ref.dtype)


def _lstm_seq_kernel(xs_ref, h0_ref, c0_ref, wih_ref, whh_ref, bg_ref,
                     wlin_ref, blin_ref, outs_ref, hT_ref, cT_ref, h_s, c_s):
    """grid=(T,): weights stay VMEM-resident; h/c are carried in VMEM scratch."""
    t = pl.program_id(0)

    @pl.when(t == 0)
    def _():
        h_s[...] = h0_ref[...]
        c_s[...] = c0_ref[...]

    H = h_s.shape[-1]
    hp = wih_ref.shape[-1] // 4
    wd = wih_ref.dtype

    x = xs_ref[0]                       # (B, input_size) tile for this timestep
    h = h_s[...]
    gates = (jnp.dot(x.astype(wd), wih_ref[...], preferred_element_type=jnp.float32)
             + jnp.dot(h.astype(wd), whh_ref[...], preferred_element_type=jnp.float32)
             + bg_ref[...])

    i = jax.nn.sigmoid(gates[:, 0 * hp:0 * hp + H])
    f = jax.nn.sigmoid(gates[:, 1 * hp:1 * hp + H])
    g = jnp.tanh(gates[:, 2 * hp:2 * hp + H])
    o = jax.nn.sigmoid(gates[:, 3 * hp:3 * hp + H])

    c_new = f * c_s[...] + i * g
    h_new = o * jnp.tanh(c_new)

    h_s[...] = h_new                    # state carried across grid steps
    c_s[...] = c_new

    outs_ref[0] = (jnp.dot(h_new.astype(wlin_ref.dtype), wlin_ref[...],
                           preferred_element_type=jnp.float32)
                   + blin_ref[...]).astype(outs_ref.dtype)
    hT_ref[...] = h_new.astype(hT_ref.dtype)   # only final flush reaches HBM
    cT_ref[...] = c_new.astype(cT_ref.dtype)


# ---------------------------------------------------------------------------
# Wrappers
# ---------------------------------------------------------------------------

def _forward_impl(x, packed, last_states):
    """Single LSTMCell step + Linear (== LSTModel.forward)."""
    x = x.astype(jnp.float32)
    B = x.shape[0]
    H = packed["w_hh"].shape[0]
    O = packed["w_lin"].shape[1]
    if last_states is None:
        h0 = jnp.zeros((B, H), jnp.float32)
        c0 = jnp.zeros((B, H), jnp.float32)
    else:
        h0, c0 = last_states
        h0 = h0.astype(jnp.float32)
        c0 = c0.astype(jnp.float32)

    vmem = lambda: pl.BlockSpec(memory_space=pltpu.VMEM)
    out, hs, cs = pl.pallas_call(
        _lstm_step_kernel,
        out_shape=(jax.ShapeDtypeStruct((B, O), jnp.float32),
                   jax.ShapeDtypeStruct((B, H), jnp.float32),
                   jax.ShapeDtypeStruct((B, H), jnp.float32)),
        in_specs=[vmem() for _ in range(8)],
        out_specs=(vmem(), vmem(), vmem()),
        input_output_aliases={1: 1, 2: 2},      # h0 -> hs, c0 -> cs (in-place state)
    )(x, h0, c0, packed["w_ih"], packed["w_hh"], packed["b_gates"],
      packed["w_lin"], packed["b_lin"])
    return out, (hs, cs)


lst_model_forward = jax.jit(_forward_impl)


def _sequence_impl(xs, packed, last_states):
    """T timesteps in one pallas_call (review item #1): weights VMEM-resident."""
    xs = xs.astype(jnp.float32)
    T, B, in_size = xs.shape
    H = packed["w_hh"].shape[0]
    O = packed["w_lin"].shape[1]
    if last_states is None:
        h0 = jnp.zeros((B, H), jnp.float32)
        c0 = jnp.zeros((B, H), jnp.float32)
    else:
        h0, c0 = last_states
        h0 = h0.astype(jnp.float32)
        c0 = c0.astype(jnp.float32)

    def full(a):
        # Whole-array block, same block every step -> fetched once, VMEM-resident.
        return pl.BlockSpec(a.shape, lambda t, _nd=a.ndim: (0,) * _nd)

    grid_spec = pltpu.PrefetchScalarGridSpec(
        num_scalar_prefetch=0,
        grid=(T,),
        in_specs=[
            pl.BlockSpec((1, B, in_size), lambda t: (t, 0, 0)),   # x_t tile
            full(h0), full(c0),
            full(packed["w_ih"]), full(packed["w_hh"]), full(packed["b_gates"]),
            full(packed["w_lin"]), full(packed["b_lin"]),
        ],
        out_specs=(
            pl.BlockSpec((1, B, O), lambda t: (t, 0, 0)),         # out_t tile
            pl.BlockSpec((B, H), lambda t: (0, 0)),               # h_T
            pl.BlockSpec((B, H), lambda t: (0, 0)),               # c_T
        ),
        scratch_shapes=[pltpu.VMEM((B, H), jnp.float32),          # h carry
                        pltpu.VMEM((B, H), jnp.float32)],         # c carry
    )

    outs, hT, cT = pl.pallas_call(
        _lstm_seq_kernel,
        out_shape=(jax.ShapeDtypeStruct((T, B, O), jnp.float32),
                   jax.ShapeDtypeStruct((B, H), jnp.float32),
                   jax.ShapeDtypeStruct((B, H), jnp.float32)),
        grid_spec=grid_spec,
        input_output_aliases={1: 1, 2: 2},      # h0 -> h_T, c0 -> c_T
        compiler_params=pltpu.CompilerParams(
            dimension_semantics=("arbitrary",)),  # carried state across timesteps
    )(xs, h0, c0, packed["w_ih"], packed["w_hh"], packed["b_gates"],
      packed["w_lin"], packed["b_lin"])
    return outs, (hT, cT)


lst_model_forward_sequence = jax.jit(_sequence_impl)


# ---------------------------------------------------------------------------
# Parameter construction / packing
# ---------------------------------------------------------------------------

def init_params(key, input_size, hidden_size, output_size):
    """Deterministic init with the PyTorch parameter shapes."""
    k = jax.random.split(key, 6)
    bound = 1.0 / jnp.sqrt(hidden_size)
    return {
        "w_ih": jax.random.uniform(k[0], (4 * hidden_size, input_size), jnp.float32,
                                   -bound, bound),
        "w_hh": jax.random.uniform(k[1], (4 * hidden_size, hidden_size), jnp.float32,
                                   -bound, bound),
        "b_ih": jax.random.uniform(k[2], (4 * hidden_size,), jnp.float32, -bound, bound),
        "b_hh": jax.random.uniform(k[3], (4 * hidden_size,), jnp.float32, -bound, bound),
        "w_lin": jax.random.uniform(k[4], (output_size, hidden_size), jnp.float32,
                                    -bound, bound),
        "b_lin": jax.random.uniform(k[5], (output_size,), jnp.float32, -bound, bound),
    }


def pack_params(raw, param_dtype=jnp.bfloat16):
    """One-time repack of PyTorch-shaped params into the kernel layout.

    Each gate's columns are padded to a 128-lane block so in-kernel gate slices
    are lane-tile aligned.  Matmul operands are stored in `param_dtype` (bf16
    feeds the MXU at native rate on v5e/v6e/v7x); biases stay f32 and are added
    after the f32-accumulated dot.
    """
    in_size = raw["w_ih"].shape[1]
    H = raw["w_hh"].shape[1]
    O = raw["w_lin"].shape[0]
    hp = _round_up(H, 128)

    bias = (raw["b_ih"] + raw["b_hh"]).astype(jnp.float32)
    w_ih = jnp.zeros((in_size, 4 * hp), param_dtype)
    w_hh = jnp.zeros((H, 4 * hp), param_dtype)
    b_g = jnp.zeros((1, 4 * hp), jnp.float32)
    for g in range(4):                               # gate order [i, f, g, o]
        col = g * hp
        w_ih = w_ih.at[:, col:col + H].set(
            raw["w_ih"][g * H:(g + 1) * H, :].T.astype(param_dtype))
        w_hh = w_hh.at[:, col:col + H].set(
            raw["w_hh"][g * H:(g + 1) * H, :].T.astype(param_dtype))
        b_g = b_g.at[0, col:col + H].set(bias[g * H:(g + 1) * H])

    return {
        "w_ih": w_ih,                                    # (in, 4*hp)
        "w_hh": w_hh,                                    # (H,  4*hp)
        "b_gates": b_g,                                  # (1,  4*hp) f32
        "w_lin": raw["w_lin"].T.astype(param_dtype),     # (H, O)
        "b_lin": raw["b_lin"].reshape(1, O).astype(jnp.float32),   # (1, O) f32
    }


# ---------------------------------------------------------------------------
# Pure-JAX references
# ---------------------------------------------------------------------------

def _reference_forward(x, raw, h0, c0):
    H = raw["w_hh"].shape[1]
    gates = x @ raw["w_ih"].T + h0 @ raw["w_hh"].T + raw["b_ih"] + raw["b_hh"]
    i = jax.nn.sigmoid(gates[:, 0 * H:1 * H])
    f = jax.nn.sigmoid(gates[:, 1 * H:2 * H])
    g = jnp.tanh(gates[:, 2 * H:3 * H])
    o = jax.nn.sigmoid(gates[:, 3 * H:4 * H])
    c = f * c0 + i * g
    h = o * jnp.tanh(c)
    out = h @ raw["w_lin"].T + raw["b_lin"]
    return out, (h, c)


def _reference_sequence(xs, raw, h0, c0):
    outs = []
    h, c = h0, c0
    for t in range(xs.shape[0]):
        o, (h, c) = _reference_forward(xs[t], raw, h, c)
        outs.append(o)
    return jnp.stack(outs), (h, c)


# ---------------------------------------------------------------------------
# Self-test
# ---------------------------------------------------------------------------

if __name__ == "__main__":
    INPUT_SIZE, HIDDEN_SIZE, OUTPUT_SIZE, BATCH, SEQ = 16, 32, 8, 4, 8

    key = jax.random.PRNGKey(0)
    kx, kp, ks = jax.random.split(key, 3)
    x = jax.random.normal(kx, (BATCH, INPUT_SIZE), jnp.float32)
    xs = jax.random.normal(ks, (SEQ, BATCH, INPUT_SIZE), jnp.float32)
    raw = init_params(kp, INPUT_SIZE, HIDDEN_SIZE, OUTPUT_SIZE)

    h0 = jnp.zeros((BATCH, HIDDEN_SIZE), jnp.float32)
    c0 = jnp.zeros((BATCH, HIDDEN_SIZE), jnp.float32)

    # --- f32-packed weights: tight check of the kernel math -----------------
    packed_f32 = pack_params(raw, param_dtype=jnp.float32)

    out, (hs, cs) = lst_model_forward(x, packed_f32, None)
    jax.block_until_ready((out, hs, cs))
    ref_out, (ref_h, ref_c) = _reference_forward(x, raw, h0, c0)
    assert jnp.allclose(out, ref_out, atol=1e-5, rtol=1e-5)
    assert jnp.allclose(hs, ref_h, atol=1e-5, rtol=1e-5)
    assert jnp.allclose(cs, ref_c, atol=1e-5, rtol=1e-5)

    # Carried (non-zero) state path.
    out2, (hs2, cs2) = lst_model_forward(x, packed_f32, (hs, cs))
    jax.block_until_ready((out2, hs2, cs2))
    ref_out2, (ref_h2, ref_c2) = _reference_forward(x, raw, ref_h, ref_c)
    assert jnp.allclose(out2, ref_out2, atol=1e-5, rtol=1e-5)
    assert jnp.allclose(hs2, ref_h2, atol=1e-5, rtol=1e-5)
    assert jnp.allclose(cs2, ref_c2, atol=1e-5, rtol=1e-5)

    # Sequence kernel (grid=(T,)), f32 weights: tight check of in-kernel carry.
    outs, (hT, cT) = lst_model_forward_sequence(xs, packed_f32, None)
    jax.block_until_ready((outs, hT, cT))
    ref_outs, (ref_hT, ref_cT) = _reference_sequence(xs, raw, h0, c0)
    assert jnp.allclose(outs, ref_outs, atol=1e-4, rtol=1e-4)
    assert jnp.allclose(hT, ref_hT, atol=1e-4, rtol=1e-4)
    assert jnp.allclose(cT, ref_cT, atol=1e-4, rtol=1e-4)

    # --- bf16 MXU-fed weights (default packing): looser tolerance -----------
    packed_bf16 = pack_params(raw)

    out_b, (hs_b, cs_b) = lst_model_forward(x, packed_bf16, None)
    jax.block_until_ready((out_b, hs_b, cs_b))
    assert jnp.allclose(out_b, ref_out, atol=2e-2, rtol=2e-2)
    assert jnp.allclose(hs_b, ref_h, atol=2e-2, rtol=2e-2)
    assert jnp.allclose(cs_b, ref_c, atol=2e-2, rtol=2e-2)

    outs_b, (hT_b, cT_b) = lst_model_forward_sequence(xs, packed_bf16, None)
    jax.block_until_ready((outs_b, hT_b, cT_b))
    assert jnp.allclose(outs_b, ref_outs, atol=5e-2, rtol=5e-2)
    assert jnp.allclose(hT_b, ref_hT, atol=5e-2, rtol=5e-2)
    assert jnp.allclose(cT_b, ref_cT, atol=5e-2, rtol=5e-2)

    print("KERNEL_OK")
</pallas_src>

<mosaic_0001>
module attributes {stable_mosaic.version = 11 : i64} {
  func.func @_lstm_step_kernel(%arg0: memref<4x16xf32, #tpu.memory_space<vmem>>, %arg1: memref<4x32xf32, #tpu.memory_space<vmem>>, %arg2: memref<4x32xf32, #tpu.memory_space<vmem>>, %arg3: memref<16x512xf32, #tpu.memory_space<vmem>>, %arg4: memref<32x512xf32, #tpu.memory_space<vmem>>, %arg5: memref<1x512xf32, #tpu.memory_space<vmem>>, %arg6: memref<32x8xf32, #tpu.memory_space<vmem>>, %arg7: memref<1x8xf32, #tpu.memory_space<vmem>>, %arg8: memref<4x8xf32, #tpu.memory_space<vmem>>, %arg9: memref<4x32xf32, #tpu.memory_space<vmem>>, %arg10: memref<4x32xf32, #tpu.memory_space<vmem>>) attributes {dimension_semantics = [], scalar_prefetch = 0 : i64, scratch_operands = 0 : i64, tpu.core_type = #tpu.core_type<tc>} {
    %c0 = arith.constant 0 : index
    %c0_0 = arith.constant 0 : index
    %0 = vector.load %arg0[%c0, %c0_0] : memref<4x16xf32, #tpu.memory_space<vmem>>, vector<4x16xf32>
    %c0_1 = arith.constant 0 : index
    %c0_2 = arith.constant 0 : index
    %1 = vector.load %arg3[%c0_1, %c0_2] : memref<16x512xf32, #tpu.memory_space<vmem>>, vector<16x512xf32>
    %cst = arith.constant dense<0.000000e+00> : vector<4x512xf32>
    %2 = tpu.matmul %0, %1, %cst {dimension_numbers = #tpu.dot_dimension_numbers<[1], [0], [0], [1], [0, 0, 1, 1], [], []>} : vector<4x16xf32>, vector<16x512xf32>, vector<4x512xf32> -> vector<4x512xf32>
    %c0_3 = arith.constant 0 : index
    %c0_4 = arith.constant 0 : index
    %3 = vector.load %arg1[%c0_3, %c0_4] : memref<4x32xf32, #tpu.memory_space<vmem>>, vector<4x32xf32>
    %c0_5 = arith.constant 0 : index
    %c0_6 = arith.constant 0 : index
    %4 = vector.load %arg4[%c0_5, %c0_6] : memref<32x512xf32, #tpu.memory_space<vmem>>, vector<32x512xf32>
    %cst_7 = arith.constant dense<0.000000e+00> : vector<4x512xf32>
    %5 = tpu.matmul %3, %4, %cst_7 {dimension_numbers = #tpu.dot_dimension_numbers<[1], [0], [0], [1], [0, 0, 1, 1], [], []>} : vector<4x32xf32>, vector<32x512xf32>, vector<4x512xf32> -> vector<4x512xf32>
    %6 = arith.addf %2, %5 : vector<4x512xf32>
    %c0_8 = arith.constant 0 : index
    %c0_9 = arith.constant 0 : index
    %7 = vector.load %arg5[%c0_8, %c0_9] : memref<1x512xf32, #tpu.memory_space<vmem>>, vector<1x512xf32>
    %8 = vector.broadcast %7 : vector<1x512xf32> to vector<4x512xf32>
    %9 = arith.addf %6, %8 : vector<4x512xf32>
    %10 = vector.extract_strided_slice %9 {offsets = [0, 0], sizes = [4, 32], strides = [1, 1]} : vector<4x512xf32> to vector<4x32xf32>
    %11 = arith.negf %10 : vector<4x32xf32>
    %12 = math.exp %11 : vector<4x32xf32>
    %cst_10 = arith.constant 1.000000e+00 : f32
    %13 = vector.broadcast %cst_10 : f32 to vector<4x32xf32>
    %14 = arith.addf %13, %12 : vector<4x32xf32>
    %15 = arith.divf %13, %14 : vector<4x32xf32>
    %16 = vector.extract_strided_slice %9 {offsets = [0, 128], sizes = [4, 32], strides = [1, 1]} : vector<4x512xf32> to vector<4x32xf32>
    %17 = arith.negf %16 : vector<4x32xf32>
    %18 = math.exp %17 : vector<4x32xf32>
    %cst_11 = arith.constant 1.000000e+00 : f32
    %19 = vector.broadcast %cst_11 : f32 to vector<4x32xf32>
    %20 = arith.addf %19, %18 : vector<4x32xf32>
    %21 = arith.divf %19, %20 : vector<4x32xf32>
    %22 = vector.extract_strided_slice %9 {offsets = [0, 256], sizes = [4, 32], strides = [1, 1]} : vector<4x512xf32> to vector<4x32xf32>
    %23 = math.tanh %22 : vector<4x32xf32>
    %24 = vector.extract_strided_slice %9 {offsets = [0, 384], sizes = [4, 32], strides = [1, 1]} : vector<4x512xf32> to vector<4x32xf32>
    %25 = arith.negf %24 : vector<4x32xf32>
    %26 = math.exp %25 : vector<4x32xf32>
    %cst_12 = arith.constant 1.000000e+00 : f32
    %27 = vector.broadcast %cst_12 : f32 to vector<4x32xf32>
    %28 = arith.addf %27, %26 : vector<4x32xf32>
    %29 = arith.divf %27, %28 : vector<4x32xf32>
    %c0_13 = arith.constant 0 : index
    %c0_14 = arith.constant 0 : index
    %30 = vector.load %arg2[%c0_13, %c0_14] : memref<4x32xf32, #tpu.memory_space<vmem>>, vector<4x32xf32>
    %31 = arith.mulf %21, %30 : vector<4x32xf32>
    %32 = arith.mulf %15, %23 : vector<4x32xf32>
    %33 = arith.addf %31, %32 : vector<4x32xf32>
    %34 = math.tanh %33 : vector<4x32xf32>
    %35 = arith.mulf %29, %34 : vector<4x32xf32>
    %c0_15 = arith.constant 0 : index
    %c0_16 = arith.constant 0 : index
    %36 = vector.load %arg10[%c0_15, %c0_16] : memref<4x32xf32, #tpu.memory_space<vmem>>, vector<4x32xf32>
    tpu.vector_store %arg10[%c0_15, %c0_16], %33 {strides = array<i32>} : memref<4x32xf32, #tpu.memory_space<vmem>>, vector<4x32xf32>,
    %c0_17 = arith.constant 0 : index
    %c0_18 = arith.constant 0 : index
    %37 = vector.load %arg9[%c0_17, %c0_18] : memref<4x32xf32, #tpu.memory_space<vmem>>, vector<4x32xf32>
    tpu.vector_store %arg9[%c0_17, %c0_18], %35 {strides = array<i32>} : memref<4x32xf32, #tpu.memory_space<vmem>>, vector<4x32xf32>,
    %c0_19 = arith.constant 0 : index
    %c0_20 = arith.constant 0 : index
    %38 = vector.load %arg6[%c0_19, %c0_20] : memref<32x8xf32, #tpu.memory_space<vmem>>, vector<32x8xf32>
    %cst_21 = arith.constant dense<0.000000e+00> : vector<4x8xf32>
    %39 = tpu.matmul %35, %38, %cst_21 {dimension_numbers = #tpu.dot_dimension_numbers<[1], [0], [0], [1], [0, 0, 1, 1], [], []>} : vector<4x32xf32>, vector<32x8xf32>, vector<4x8xf32> -> vector<4x8xf32>
    %c0_22 = arith.constant 0 : index
    %c0_23 = arith.constant 0 : index
    %40 = vector.load %arg7[%c0_22, %c0_23] : memref<1x8xf32, #tpu.memory_space<vmem>>, vector<1x8xf32>
    %41 = vector.broadcast %40 : vector<1x8xf32> to vector<4x8xf32>
    %42 = arith.addf %39, %41 : vector<4x8xf32>
    %c0_24 = arith.constant 0 : index
    %c0_25 = arith.constant 0 : index
    %43 = vector.load %arg8[%c0_24, %c0_25] : memref<4x8xf32, #tpu.memory_space<vmem>>, vector<4x8xf32>
    tpu.vector_store %arg8[%c0_24, %c0_25], %42 {strides = array<i32>} : memref<4x8xf32, #tpu.memory_space<vmem>>, vector<4x8xf32>,
    return
  }
}

</mosaic_0001>

<llo_original>
// kernel: _forward_impl.1
$region0: #{_forward_impl.1}
  #allocation0 [shape = 'u32[]', space=smem, size = 0x4, offset = 0x4, fixed_abs, tag = 'smem constant byte address 0x4 - core index']
  #allocation1 [shape = 'u32[144,128]{1,0:T(1,128)}', space=vmem, size = 0x12000, scoped, tag = 'internal scratch']
  %s0 = inlined_call_operand.vmem [shape: f32[4,16], index: 0, kind: input, shape index: {}]
  %s1 = inlined_call_operand.hbm [shape: f32[4,32], index: 1, kind: input, shape index: {}, may-alias: {1,9}]
  %s2 = inlined_call_operand.hbm [shape: f32[4,32], index: 2, kind: input, shape index: {}, may-alias: {2,10}]
  %s3 = inlined_call_operand.hbm [shape: f32[16,512], index: 3, kind: input, shape index: {}]
  %s4 = inlined_call_operand.hbm [shape: f32[32,512], index: 4, kind: input, shape index: {}]
  %s5 = inlined_call_operand.vmem [shape: f32[1,512], index: 5, kind: input, shape index: {}]
  %s6 = inlined_call_operand.vmem [shape: f32[32,8], index: 6, kind: input, shape index: {}]
  %s7 = inlined_call_operand.vmem [shape: f32[1,8], index: 7, kind: input, shape index: {}]
  %s8 = inlined_call_operand.hbm [shape: f32[4,8], index: 8, kind: output, shape index: {0}]
  %s9 = inlined_call_operand.hbm [shape: f32[4,32], index: 9, kind: output, shape index: {1}, may-alias: {1,9}]
  %s10 = inlined_call_operand.hbm [shape: f32[4,32], index: 10, kind: output, shape index: {2}, may-alias: {2,10}]
  %11 = xla_tuple %s8, %s9, %s10
  %s12 = sld [smem:[#allocation0]]
  $region74: #{_forward_impl.1} parent=0
    _
  %s14 = ssub.s32 1, %s12
  %s15 = scalar_select 0, %s14, %s12
  $region1: #{_forward_impl.1} parent=0
    #allocation2 [shape = 'u8[2048]{0}', space=vmem, size = 0x800, scoped, tag = 'input window, operand 1, single buffered']
    #allocation3 [shape = 's32[1]{0}', space=sflag, size = 0x4, scoped, tag = 'scoped memory for _forward_impl.1']
    #allocation4 [shape = 's32[1]{0}', space=sflag, size = 0x4, scoped, tag = 'scoped memory for _forward_impl.1']
    #allocation5 [shape = 'u8[2048]{0}', space=vmem, size = 0x800, scoped, tag = 'input window, operand 2, single buffered']
    #allocation6 [shape = 's32[1]{0}', space=sflag, size = 0x4, scoped, tag = 'scoped memory for _forward_impl.1']
    #allocation7 [shape = 'u8[32768]{0}', space=vmem, size = 0x8000, scoped, tag = 'input window, operand 3, single buffered']
    #allocation8 [shape = 'u8[65536]{0}', space=vmem, size = 0x10000, scoped, tag = 'input window, operand 4, single buffered']
    #allocation9 [shape = 's32[1]{0}', space=sflag, size = 0x4, scoped, tag = 'scoped memory for _forward_impl.1']
    #allocation10 [shape = 'u8[2048]{0}', space=vmem, size = 0x800, scoped, tag = 'output window, operand 0, single buffered']
    #allocation11 [shape = 'u8[2048]{0}', space=vmem, size = 0x800, scoped, tag = 'output window, operand 1, single buffered']
    #allocation12 [shape = 's32[1]{0}', space=sflag, size = 0x4, scoped, tag = 'scoped memory for _forward_impl.1']
    #allocation13 [shape = 'u8[2048]{0}', space=vmem, size = 0x800, scoped, tag = 'output window, operand 2, single buffered']
    %16 = vsyncpa [#allocation3], 0
    %17 = vsyncpa [#allocation6], 0
    %18 = vsyncpa [#allocation9], 0
    %19 = vsyncpa [#allocation4], 0
    %20 = vsyncpa [#allocation12], 0
    // Predicated region
    $region2: #{_forward_impl.1} parent=1 // pred_check
      _
    $region3: #{_forward_impl.1} parent=1 // pred_check_branch
      %22 = sbr.rel (0) target = $region5
    $region4: #{_forward_impl.1} parent=1 // pred_region
      _
    $region5: #{_forward_impl.1} parent=1 // pred_fallthru
      _
    // Predicated region
    $region6: #{_forward_impl.1} parent=1 // pred_check
      _
    $region7: #{_forward_impl.1} parent=1 // pred_check_branch
      %24 = sbr.rel (0) target = $region9
    $region8: #{_forward_impl.1} parent=1 // pred_region
      %s26 = ssub.s32 64, 64
      %27 = vsyncadd [#allocation3], %s26
      %s29 = sshll.u32 [#allocation2], 4
      %s30 = int_to_ptr.vmem [resolvable:$true] %s29
      %32 = dma.hbm_to_vmem [thread:$0]  %s1, 64, %s30, [#allocation3]
    $region9: #{_forward_impl.1} parent=1 // pred_fallthru
      _
    // Predicated region
    $region10: #{_forward_impl.1} parent=1 // pred_check
      _
    $region11: #{_forward_impl.1} parent=1 // pred_check_branch
      %34 = sbr.rel (0) target = $region13
    $region12: #{_forward_impl.1} parent=1 // pred_region
      %s36 = ssub.s32 64, 64
      %37 = vsyncadd [#allocation6], %s36
      %s39 = sshll.u32 [#allocation5], 4
      %s40 = int_to_ptr.vmem [resolvable:$true] %s39
      %42 = dma.hbm_to_vmem [thread:$0]  %s2, 64, %s40, [#allocation6]
    $region13: #{_forward_impl.1} parent=1 // pred_fallthru
      _
    // Predicated region
    $region14: #{_forward_impl.1} parent=1 // pred_check
      _
    $region15: #{_forward_impl.1} parent=1 // pred_check_branch
      %44 = sbr.rel (0) target = $region17
    $region16: #{_forward_impl.1} parent=1 // pred_region
      %s46 = ssub.s32 1024, 1024
      %47 = vsyncadd [#allocation6], %s46
      %s48 = sshll.u32 [#allocation7], 4
      %s49 = int_to_ptr.vmem [resolvable:$true] %s48
      %54 = dma.hbm_to_vmem [thread:$0]  %s3, 1024, %s49, [#allocation6], 512, 512, 32
    $region17: #{_forward_impl.1} parent=1 // pred_fallthru
      _
    // Predicated region
    $region18: #{_forward_impl.1} parent=1 // pred_check
      _
    $region19: #{_forward_impl.1} parent=1 // pred_check_branch
      %56 = sbr.rel (0) target = $region21
    $region20: #{_forward_impl.1} parent=1 // pred_region
      %s58 = ssub.s32 2048, 2048
      %59 = vsyncadd [#allocation9], %s58
      %s60 = sshll.u32 [#allocation8], 4
      %s61 = int_to_ptr.vmem [resolvable:$true] %s60
      %66 = dma.hbm_to_vmem [thread:$0]  %s4, 2048, %s61, [#allocation9], 512, 512, 32
    $region21: #{_forward_impl.1} parent=1 // pred_fallthru
      _
    // Predicated region
    $region22: #{_forward_impl.1} parent=1 // pred_check
      _
    $region23: #{_forward_impl.1} parent=1 // pred_check_branch
      %68 = sbr.rel (0) target = $region25
    $region24: #{_forward_impl.1} parent=1 // pred_region
      _
    $region25: #{_forward_impl.1} parent=1 // pred_fallthru
      _
    // Predicated region
    $region26: #{_forward_impl.1} parent=1 // pred_check
      _
    $region27: #{_forward_impl.1} parent=1 // pred_check_branch
      %70 = sbr.rel (0) target = $region29
    $region28: #{_forward_impl.1} parent=1 // pred_region
      _
    $region29: #{_forward_impl.1} parent=1 // pred_fallthru
      _
    // Predicated region
    $region30: #{_forward_impl.1} parent=1 // pred_check
      _
    $region31: #{_forward_impl.1} parent=1 // pred_check_branch
      %72 = sbr.rel (0) target = $region33
    $region32: #{_forward_impl.1} parent=1 // pred_region
      _
    $region33: #{_forward_impl.1} parent=1 // pred_fallthru
      _
    // Predicated region
    $region34: #{_forward_impl.1} parent=1 // pred_check
      _
    $region35: #{_forward_impl.1} parent=1 // pred_check_branch
      %74 = sbr.rel (0) target = $region37
    $region36: #{_forward_impl.1} parent=1 // pred_region
      %75 = dma.done [#allocation3], 64
    $region37: #{_forward_impl.1} parent=1 // pred_fallthru
      _
    // Predicated region
    $region38: #{_forward_impl.1} parent=1 // pred_check
      _
    $region39: #{_forward_impl.1} parent=1 // pred_check_branch
      %77 = sbr.rel (0) target = $region41
    $region40: #{_forward_impl.1} parent=1 // pred_region
      %78 = dma.done [#allocation6], 64
    $region41: #{_forward_impl.1} parent=1 // pred_fallthru
      _
    // Predicated region
    $region42: #{_forward_impl.1} parent=1 // pred_check
      _
    $region43: #{_forward_impl.1} parent=1 // pred_check_branch
      %80 = sbr.rel (0) target = $region45
    $region44: #{_forward_impl.1} parent=1 // pred_region
      %81 = dma.done [#allocation6], 1024
    $region45: #{_forward_impl.1} parent=1 // pred_fallthru
      _
    // Predicated region
    $region46: #{_forward_impl.1} parent=1 // pred_check
      _
    $region47: #{_forward_impl.1} parent=1 // pred_check_branch
      %83 = sbr.rel (0) target = $region49
    $region48: #{_forward_impl.1} parent=1 // pred_region
      %84 = dma.done [#allocation9], 2048
    $region49: #{_forward_impl.1} parent=1 // pred_fallthru
      _
    %v85 = vld [vmem:[%s0] sm:$0xf]
    %v86 = vld [vmem:[#allocation7] sm:$0xff]
    %v87 = vld [vmem:[#allocation7 + $0x8] sm:$0xff]
    %v88 = vld [vmem:[#allocation7 + $0x10] sm:$0xff]
    %v89 = vld [vmem:[#allocation7 + $0x18] sm:$0xff]
    %v90 = vld [vmem:[#allocation7 + $0x20] sm:$0xff]
    %v91 = vld [vmem:[#allocation7 + $0x28] sm:$0xff]
    %v92 = vld [vmem:[#allocation7 + $0x30] sm:$0xff]
    %v93 = vld [vmem:[#allocation7 + $0x38] sm:$0xff]
    %v94 = vld [vmem:[#allocation2] sm:$0xf]
    %v95 = vld [vmem:[#allocation8] sm:$0xff]
    %v96 = vld [vmem:[#allocation8 + $0x8] sm:$0xff]
    %v97 = vld [vmem:[#allocation8 + $0x10] sm:$0xff]
    %v98 = vld [vmem:[#allocation8 + $0x18] sm:$0xff]
    %v99 = vld [vmem:[#allocation8 + $0x20] sm:$0xff]
    %v100 = vld [vmem:[#allocation8 + $0x28] sm:$0xff]
    %v101 = vld [vmem:[#allocation8 + $0x30] sm:$0xff]
    %v102 = vld [vmem:[#allocation8 + $0x38] sm:$0xff]
    %v103 = vld [vmem:[#allocation8 + $0x40] sm:$0xff]
    %v104 = vld [vmem:[#allocation8 + $0x48] sm:$0xff]
    %v105 = vld [vmem:[#allocation8 + $0x50] sm:$0xff]
    %v106 = vld [vmem:[#allocation8 + $0x58] sm:$0xff]
    %v107 = vld [vmem:[#allocation8 + $0x60] sm:$0xff]
    %v108 = vld [vmem:[#allocation8 + $0x68] sm:$0xff]
    %v109 = vld [vmem:[#allocation8 + $0x70] sm:$0xff]
    %v110 = vld [vmem:[#allocation8 + $0x78] sm:$0xff]
    %vm111 = vcmask 261120
    %v113 = vsel %vm111, %v94, 0
    %115 = vmatprep.subr.mxu0 0.0
    %116 = vmatpush1.msra.mxu0 0.0
    %117 = vmatprep.subr.mxu0 0.0
    %118 = vmatpush1.msra.mxu0 0.0
    %119 = vmatprep.subr.mxu0 0.0
    %120 = vmatpush1.msra.mxu0 0.0
    %121 = vmatprep.subr.mxu0 0.0
    %122 = vmatpush1.msra.mxu0 0.0
    %123 = vmatprep.subr.mxu0 0.0
    %124 = vmatpush1.msra.mxu0 0.0
    %125 = vmatprep.subr.mxu0 0.0
    %126 = vmatpush1.msra.mxu0 0.0
    %127 = vmatprep.subr.mxu0 0.0
    %128 = vmatpush1.msra.mxu0 0.0
    %129 = vmatprep.subr.mxu0 0.0
    %130 = vmatpush1.msra.mxu0 0.0
    %131 = vmatprep.subr.mxu0 0.0
    %132 = vmatpush1.msra.mxu0 0.0
    %133 = vmatprep.subr.mxu0 0.0
    %134 = vmatpush1.msra.mxu0 0.0
    %135 = vmatprep.subr.mxu0 0.0
    %136 = vmatpush1.msra.mxu0 0.0
    %137 = vmatprep.subr.mxu0 0.0
    %138 = vmatpush1.msra.mxu0 0.0
    %139 = vmatprep.subr.mxu0 %v108
    %140 = vmatpush1.msra.mxu0 %v107
    %141 = vmatprep.subr.mxu0 %v104
    %142 = vmatpush1.msra.mxu0 %v103
    %143 = vmatprep.subr.mxu0 %v100
    %144 = vmatpush1.msra.mxu0 %v99
    %145 = vmatprep.subr.mxu0 %v96
    %146 = vmatpush1.msra.mxu0 %v95
    %147 = vmatprep.subr.mxu0 0.0
    %148 = vmatpush2.msra.mxu0 0.0
    %149 = vmatprep.subr.mxu0 0.0
    %150 = vmatpush2.msra.mxu0 0.0
    %151 = vmatprep.subr.mxu0 0.0
    %152 = vmatpush2.msra.mxu0 0.0
    %153 = vmatprep.subr.mxu0 0.0
    %154 = vmatpush2.msra.mxu0 0.0
    %155 = vmatprep.subr.mxu0 0.0
    %156 = vmatpush2.msra.mxu0 0.0
    %157 = vmatprep.subr.mxu0 0.0
    %158 = vmatpush2.msra.mxu0 0.0
    %159 = vmatprep.subr.mxu0 0.0
    %160 = vmatpush2.msra.mxu0 0.0
    %161 = vmatprep.subr.mxu0 0.0
    %162 = vmatpush2.msra.mxu0 0.0
    %163 = vmatprep.subr.mxu0 0.0
    %164 = vmatpush2.msra.mxu0 0.0
    %165 = vmatprep.subr.mxu0 0.0
    %166 = vmatpush2.msra.mxu0 0.0
    %167 = vmatprep.subr.mxu0 0.0
    %168 = vmatpush2.msra.mxu0 0.0
    %169 = vmatprep.subr.mxu0 0.0
    %170 = vmatpush2.msra.mxu0 0.0
    %171 = vmatprep.subr.mxu0 0.0
    %172 = vmatpush2.msra.mxu0 0.0
    %173 = vmatprep.subr.mxu0 0.0
    %174 = vmatpush2.msra.mxu0 0.0
    %175 = vmatprep.subr.mxu0 0.0
    %176 = vmatpush2.msra.mxu0 0.0
    %177 = vmatprep.subr.mxu0 0.0
    %178 = vmatpush2.msra.mxu0 0.0
    %179 = vmatprep.mubr.f32.mxu0 0.0
    %180 = vmatmul.mubr.f32.gmra.mxu0 %v113
    %v181 = vpop.f32.mrf.mxu0
    %v182 = vadd.f32 0.0, %v181
    %v183 = vpop.f32.mrf.mxu0
    %v184 = vadd.f32 0.0, %v183
    %185 = vdwg.mxu0
    %186 = vmatprep.subr.mxu0 0.0
    %187 = vmatpush1.msra.mxu0 0.0
    %188 = vmatprep.subr.mxu0 0.0
    %189 = vmatpush1.msra.mxu0 0.0
    %190 = vmatprep.subr.mxu0 0.0
    %191 = vmatpush1.msra.mxu0 0.0
    %192 = vmatprep.subr.mxu0 0.0
    %193 = vmatpush1.msra.mxu0 0.0
    %194 = vmatprep.subr.mxu0 0.0
    %195 = vmatpush1.msra.mxu0 0.0
    %196 = vmatprep.subr.mxu0 0.0
    %197 = vmatpush1.msra.mxu0 0.0
    %198 = vmatprep.subr.mxu0 0.0
    %199 = vmatpush1.msra.mxu0 0.0
    %200 = vmatprep.subr.mxu0 0.0
    %201 = vmatpush1.msra.mxu0 0.0
    %202 = vmatprep.subr.mxu0 0.0
    %203 = vmatpush1.msra.mxu0 0.0
    %204 = vmatprep.subr.mxu0 0.0
    %205 = vmatpush1.msra.mxu0 0.0
    %206 = vmatprep.subr.mxu0 0.0
    %207 = vmatpush1.msra.mxu0 0.0
    %208 = vmatprep.subr.mxu0 0.0
    %209 = vmatpush1.msra.mxu0 0.0
    %210 = vmatprep.subr.mxu0 %v110
    %211 = vmatpush1.msra.mxu0 %v109
    %212 = vmatprep.subr.mxu0 %v106
    %213 = vmatpush1.msra.mxu0 %v105
    %214 = vmatprep.subr.mxu0 %v102
    %215 = vmatpush1.msra.mxu0 %v101
    %216 = vmatprep.subr.mxu0 %v98
    %217 = vmatpush1.msra.mxu0 %v97
    %218 = vmatprep.subr.mxu0 0.0
    %219 = vmatpush2.msra.mxu0 0.0
    %220 = vmatprep.subr.mxu0 0.0
    %221 = vmatpush2.msra.mxu0 0.0
    %222 = vmatprep.subr.mxu0 0.0
    %223 = vmatpush2.msra.mxu0 0.0
    %224 = vmatprep.subr.mxu0 0.0
    %225 = vmatpush2.msra.mxu0 0.0
    %226 = vmatprep.subr.mxu0 0.0
    %227 = vmatpush2.msra.mxu0 0.0
    %228 = vmatprep.subr.mxu0 0.0
    %229 = vmatpush2.msra.mxu0 0.0
    %230 = vmatprep.subr.mxu0 0.0
    %231 = vmatpush2.msra.mxu0 0.0
    %232 = vmatprep.subr.mxu0 0.0
    %233 = vmatpush2.msra.mxu0 0.0
    %234 = vmatprep.subr.mxu0 0.0
    %235 = vmatpush2.msra.mxu0 0.0
    %236 = vmatprep.subr.mxu0 0.0
    %237 = vmatpush2.msra.mxu0 0.0
    %238 = vmatprep.subr.mxu0 0.0
    %239 = vmatpush2.msra.mxu0 0.0
    %240 = vmatprep.subr.mxu0 0.0
    %241 = vmatpush2.msra.mxu0 0.0
    %242 = vmatprep.subr.mxu0 0.0
    %243 = vmatpush2.msra.mxu0 0.0
    %244 = vmatprep.subr.mxu0 0.0
    %245 = vmatpush2.msra.mxu0 0.0
    %246 = vmatprep.subr.mxu0 0.0
    %247 = vmatpush2.msra.mxu0 0.0
    %248 = vmatprep.subr.mxu0 0.0
    %249 = vmatpush2.msra.mxu0 0.0
    %250 = vmatprep.mubr.f32.mxu0 0.0
    %251 = vmatmul.mubr.f32.gmra.mxu0 %v113
    %v252 = vpop.f32.mrf.mxu0
    %v253 = vadd.f32 0.0, %v252
    %v254 = vpop.f32.mrf.mxu0
    %v255 = vadd.f32 0.0, %v254
    %256 = vdwg.mxu0
    %vm257 = vcmask 130048
    %v259 = vsel %vm257, %v85, 0
    %261 = vmatprep.subr.mxu0 0.0
    %262 = vmatpush1.msra.mxu0 0.0
    %263 = vmatprep.subr.mxu0 0.0
    %264 = vmatpush1.msra.mxu0 0.0
    %265 = vmatprep.subr.mxu0 0.0
    %266 = vmatpush1.msra.mxu0 0.0
    %267 = vmatprep.subr.mxu0 0.0
    %268 = vmatpush1.msra.mxu0 0.0
    %269 = vmatprep.subr.mxu0 0.0
    %270 = vmatpush1.msra.mxu0 0.0
    %271 = vmatprep.subr.mxu0 0.0
    %272 = vmatpush1.msra.mxu0 0.0
    %273 = vmatprep.subr.mxu0 0.0
    %274 = vmatpush1.msra.mxu0 0.0
    %275 = vmatprep.subr.mxu0 0.0
    %276 = vmatpush1.msra.mxu0 0.0
    %277 = vmatprep.subr.mxu0 0.0
    %278 = vmatpush1.msra.mxu0 0.0
    %279 = vmatprep.subr.mxu0 0.0
    %280 = vmatpush1.msra.mxu0 0.0
    %281 = vmatprep.subr.mxu0 0.0
    %282 = vmatpush1.msra.mxu0 0.0
    %283 = vmatprep.subr.mxu0 0.0
    %284 = vmatpush1.msra.mxu0 0.0
    %285 = vmatprep.subr.mxu0 0.0
    %286 = vmatpush1.msra.mxu0 0.0
    %287 = vmatprep.subr.mxu0 0.0
    %288 = vmatpush1.msra.mxu0 0.0
    %289 = vmatprep.subr.mxu0 %v91
    %290 = vmatpush1.msra.mxu0 %v90
    %291 = vmatprep.subr.mxu0 %v87
    %292 = vmatpush1.msra.mxu0 %v86
    %293 = vmatprep.subr.mxu0 0.0
    %294 = vmatpush2.msra.mxu0 0.0
    %295 = vmatprep.subr.mxu0 0.0
    %296 = vmatpush2.msra.mxu0 0.0
    %297 = vmatprep.subr.mxu0 0.0
    %298 = vmatpush2.msra.mxu0 0.0
    %299 = vmatprep.subr.mxu0 0.0
    %300 = vmatpush2.msra.mxu0 0.0
    %301 = vmatprep.subr.mxu0 0.0
    %302 = vmatpush2.msra.mxu0 0.0
    %303 = vmatprep.subr.mxu0 0.0
    %304 = vmatpush2.msra.mxu0 0.0
    %305 = vmatprep.subr.mxu0 0.0
    %306 = vmatpush2.msra.mxu0 0.0
    %307 = vmatprep.subr.mxu0 0.0
    %308 = vmatpush2.msra.mxu0 0.0
    %309 = vmatprep.subr.mxu0 0.0
    %310 = vmatpush2.msra.mxu0 0.0
    %311 = vmatprep.subr.mxu0 0.0
    %312 = vmatpush2.msra.mxu0 0.0
    %313 = vmatprep.subr.mxu0 0.0
    %314 = vmatpush2.msra.mxu0 0.0
    %315 = vmatprep.subr.mxu0 0.0
    %316 = vmatpush2.msra.mxu0 0.0
    %317 = vmatprep.subr.mxu0 0.0
    %318 = vmatpush2.msra.mxu0 0.0
    %319 = vmatprep.subr.mxu0 0.0
    %320 = vmatpush2.msra.mxu0 0.0
    %321 = vmatprep.subr.mxu0 0.0
    %322 = vmatpush2.msra.mxu0 0.0
    %323 = vmatprep.subr.mxu0 0.0
    %324 = vmatpush2.msra.mxu0 0.0
    %325 = vmatprep.mubr.f32.mxu0 0.0
    %326 = vmatmul.mubr.f32.gmra.mxu0 %v259
    %v327 = vpop.f32.mrf.mxu0
    %v328 = vadd.f32 %v182, %v327
    %v329 = vpop.f32.mrf.mxu0
    %v330 = vadd.f32 %v184, %v329
    %331 = vdwg.mxu0
    %332 = vmatprep.subr.mxu0 0.0
    %333 = vmatpush1.msra.mxu0 0.0
    %334 = vmatprep.subr.mxu0 0.0
    %335 = vmatpush1.msra.mxu0 0.0
    %336 = vmatprep.subr.mxu0 0.0
    %337 = vmatpush1.msra.mxu0 0.0
    %338 = vmatprep.subr.mxu0 0.0
    %339 = vmatpush1.msra.mxu0 0.0
    %340 = vmatprep.subr.mxu0 0.0
    %341 = vmatpush1.msra.mxu0 0.0
    %342 = vmatprep.subr.mxu0 0.0
    %343 = vmatpush1.msra.mxu0 0.0
    %344 = vmatprep.subr.mxu0 0.0
    %345 = vmatpush1.msra.mxu0 0.0
    %346 = vmatprep.subr.mxu0 0.0
    %347 = vmatpush1.msra.mxu0 0.0
    %348 = vmatprep.subr.mxu0 0.0
    %349 = vmatpush1.msra.mxu0 0.0
    %350 = vmatprep.subr.mxu0 0.0
    %351 = vmatpush1.msra.mxu0 0.0
    %352 = vmatprep.subr.mxu0 0.0
    %353 = vmatpush1.msra.mxu0 0.0
    %354 = vmatprep.subr.mxu0 0.0
    %355 = vmatpush1.msra.mxu0 0.0
    %356 = vmatprep.subr.mxu0 0.0
    %357 = vmatpush1.msra.mxu0 0.0
    %358 = vmatprep.subr.mxu0 0.0
    %359 = vmatpush1.msra.mxu0 0.0
    %360 = vmatprep.subr.mxu0 %v93
    %361 = vmatpush1.msra.mxu0 %v92
    %362 = vmatprep.subr.mxu0 %v89
    %363 = vmatpush1.msra.mxu0 %v88
    %364 = vmatprep.subr.mxu0 0.0
    %365 = vmatpush2.msra.mxu0 0.0
    %366 = vmatprep.subr.mxu0 0.0
    %367 = vmatpush2.msra.mxu0 0.0
    %368 = vmatprep.subr.mxu0 0.0
    %369 = vmatpush2.msra.mxu0 0.0
    %370 = vmatprep.subr.mxu0 0.0
    %371 = vmatpush2.msra.mxu0 0.0
    %372 = vmatprep.subr.mxu0 0.0
    %373 = vmatpush2.msra.mxu0 0.0
    %374 = vmatprep.subr.mxu0 0.0
    %375 = vmatpush2.msra.mxu0 0.0
    %376 = vmatprep.subr.mxu0 0.0
    %377 = vmatpush2.msra.mxu0 0.0
    %378 = vmatprep.subr.mxu0 0.0
    %379 = vmatpush2.msra.mxu0 0.0
    %380 = vmatprep.subr.mxu0 0.0
    %381 = vmatpush2.msra.mxu0 0.0
    %382 = vmatprep.subr.mxu0 0.0
    %383 = vmatpush2.msra.mxu0 0.0
    %384 = vmatprep.subr.mxu0 0.0
    %385 = vmatpush2.msra.mxu0 0.0
    %386 = vmatprep.subr.mxu0 0.0
    %387 = vmatpush2.msra.mxu0 0.0
    %388 = vmatprep.subr.mxu0 0.0
    %389 = vmatpush2.msra.mxu0 0.0
    %390 = vmatprep.subr.mxu0 0.0
    %391 = vmatpush2.msra.mxu0 0.0
    %392 = vmatprep.subr.mxu0 0.0
    %393 = vmatpush2.msra.mxu0 0.0
    %394 = vmatprep.subr.mxu0 0.0
    %395 = vmatpush2.msra.mxu0 0.0
    %396 = vmatprep.mubr.f32.mxu0 0.0
    %397 = vmatmul.mubr.f32.gmra.mxu0 %v259
    %v398 = vpop.f32.mrf.mxu0
    %v399 = vadd.f32 %v253, %v398
    %v400 = vpop.f32.mrf.mxu0
    %v401 = vadd.f32 %v255, %v400
    %402 = vdwg.mxu0
    %v403 = vld [vmem:[%s5] sm:$0xf]
    %v405 = vlaneseq
    %v406 = vshrl.u32 %v405, 7
    %v407 = vsub.s32 0, %v406
    %v408 = vrot.slane %v403, %v407
    %v409 = vlaneseq
    %v410 = vshrl.u32 %v409, 7
    %v411 = vsub.s32 1, %v410
    %v412 = vrot.slane %v403, %v411
    %v413 = vlaneseq
    %v414 = vshrl.u32 %v413, 7
    %v415 = vsub.s32 2, %v414
    %v416 = vrot.slane %v403, %v415
    %v417 = vlaneseq
    %v418 = vshrl.u32 %v417, 7
    %v419 = vsub.s32 3, %v418
    %v420 = vrot.slane %v403, %v419
    %v425 = vadd.f32 %v328, %v408
    %v426 = vadd.f32 %v330, %v412
    %v427 = vadd.f32 %v399, %v416
    %v428 = vadd.f32 %v401, %v420
    %v429 = vxor.u32 %v425, 2147483648
    %v430 = vmul.f32 %v429, 1.442695
    %v431 = vpow.pop %v430
    %v432 = vadd.f32 %v431, 1.0
    %v433 = vrcp.pop %v432
    %v434 = vmul.f32 1.0, %v433
    %v435 = vxor.u32 %v426, 2147483648
    %v436 = vmul.f32 %v435, 1.442695
    %v437 = vpow.pop %v436
    %v438 = vadd.f32 %v437, 1.0
    %v439 = vrcp.pop %v438
    %v440 = vmul.f32 1.0, %v439
    %v441 = vtanh.pop %v427
    %v442 = vxor.u32 %v428, 2147483648
    %v443 = vmul.f32 %v442, 1.442695
    %v444 = vpow.pop %v443
    %v445 = vadd.f32 %v444, 1.0
    %v446 = vrcp.pop %v445
    %v447 = vmul.f32 1.0, %v446
    %v448 = vld [vmem:[#allocation5] sm:$0xf]
    %v449 = vmul.f32 %v440, %v448
    %v450 = vmul.f32 %v434, %v441
    %v451 = vadd.f32 %v449, %v450
    %v452 = vtanh.pop %v451
    %v453 = vmul.f32 %v447, %v452
    %vm454 = vcmask 257024
    %455 = vst.msk [vmem:[#allocation13] sm:$0xf] %vm454, %v451
    %456 = vst.msk [vmem:[#allocation11] sm:$0xf] %vm454, %v453
    %v457 = vld [vmem:[%s6] sm:$0xff]
    %v458 = vld [vmem:[%s6 + $0x8] sm:$0xff]
    %v459 = vld [vmem:[%s6 + $0x10] sm:$0xff]
    %v460 = vld [vmem:[%s6 + $0x18] sm:$0xff]
    %v461 = vld [vmem:[%s7] sm:$0x1]
    %v463 = vlaneseq
    %v464 = vshrl.u32 %v463, 7
    %v465 = vsub.s32 0, %v464
    %v466 = vrot.slane %v461, %v465
    %v469 = vsel %vm111, %v453, 0
    %471 = vmatprep.subr.mxu0 0.0
    %472 = vmatpush1.msra.mxu0 0.0
    %473 = vmatprep.subr.mxu0 0.0
    %474 = vmatpush1.msra.mxu0 0.0
    %475 = vmatprep.subr.mxu0 0.0
    %476 = vmatpush1.msra.mxu0 0.0
    %477 = vmatprep.subr.mxu0 0.0
    %478 = vmatpush1.msra.mxu0 0.0
    %479 = vmatprep.subr.mxu0 0.0
    %480 = vmatpush1.msra.mxu0 0.0
    %481 = vmatprep.subr.mxu0 0.0
    %482 = vmatpush1.msra.mxu0 0.0
    %483 = vmatprep.subr.mxu0 0.0
    %484 = vmatpush1.msra.mxu0 0.0
    %485 = vmatprep.subr.mxu0 0.0
    %486 = vmatpush1.msra.mxu0 0.0
    %487 = vmatprep.subr.mxu0 0.0
    %488 = vmatpush1.msra.mxu0 0.0
    %489 = vmatprep.subr.mxu0 0.0
    %490 = vmatpush1.msra.mxu0 0.0
    %491 = vmatprep.subr.mxu0 0.0
    %492 = vmatpush1.msra.mxu0 0.0
    %493 = vmatprep.subr.mxu0 0.0
    %494 = vmatpush1.msra.mxu0 0.0
    %495 = vmatprep.subr.mxu0 0.0
    %496 = vmatpush1.msra.mxu0 %v460
    %497 = vmatprep.subr.mxu0 0.0
    %498 = vmatpush1.msra.mxu0 %v459
    %499 = vmatprep.subr.mxu0 0.0
    %500 = vmatpush1.msra.mxu0 %v458
    %501 = vmatprep.subr.mxu0 0.0
    %502 = vmatpush1.msra.mxu0 %v457
    %503 = vmatprep.subr.mxu0 0.0
    %504 = vmatpush2.msra.mxu0 0.0
    %505 = vmatprep.subr.mxu0 0.0
    %506 = vmatpush2.msra.mxu0 0.0
    %507 = vmatprep.subr.mxu0 0.0
    %508 = vmatpush2.msra.mxu0 0.0
    %509 = vmatprep.subr.mxu0 0.0
    %510 = vmatpush2.msra.mxu0 0.0
    %511 = vmatprep.subr.mxu0 0.0
    %512 = vmatpush2.msra.mxu0 0.0
    %513 = vmatprep.subr.mxu0 0.0
    %514 = vmatpush2.msra.mxu0 0.0
    %515 = vmatprep.subr.mxu0 0.0
    %516 = vmatpush2.msra.mxu0 0.0
    %517 = vmatprep.subr.mxu0 0.0
    %518 = vmatpush2.msra.mxu0 0.0
    %519 = vmatprep.subr.mxu0 0.0
    %520 = vmatpush2.msra.mxu0 0.0
    %521 = vmatprep.subr.mxu0 0.0
    %522 = vmatpush2.msra.mxu0 0.0
    %523 = vmatprep.subr.mxu0 0.0
    %524 = vmatpush2.msra.mxu0 0.0
    %525 = vmatprep.subr.mxu0 0.0
    %526 = vmatpush2.msra.mxu0 0.0
    %527 = vmatprep.subr.mxu0 0.0
    %528 = vmatpush2.msra.mxu0 0.0
    %529 = vmatprep.subr.mxu0 0.0
    %530 = vmatpush2.msra.mxu0 0.0
    %531 = vmatprep.subr.mxu0 0.0
    %532 = vmatpush2.msra.mxu0 0.0
    %533 = vmatprep.subr.mxu0 0.0
    %534 = vmatpush2.msra.mxu0 0.0
    %535 = vmatprep.mubr.f32.mxu0 0.0
    %536 = vmatmul.mubr.f32.gmra.mxu0 %v469
    %v537 = vpop.f32.mrf.mxu0
    %v538 = vadd.f32 %v466, %v537
    %v539 = vpop.f32.mrf.mxu0
    %540 = vdwg.mxu0
    %vm541 = vcmask 60416
    %542 = vst.msk [vmem:[#allocation10] sm:$0xf] %vm541, %v538
    // Predicated region
    $region50: #{_forward_impl.1} parent=1 // pred_check
      _
    $region51: #{_forward_impl.1} parent=1 // pred_check_branch
      %544 = sbr.rel (0) target = $region53
    $region52: #{_forward_impl.1} parent=1 // pred_region
      %s546 = ssub.s32 64, 64
      %547 = vsyncadd [#allocation4], %s546
      %s549 = sshll.u32 [#allocation10], 4
      %s550 = int_to_ptr.vmem [resolvable:$true] %s549
      %552 = dma.vmem_to_hbm [thread:$0]  %s550, 64, %s8, [#allocation4]
    $region53: #{_forward_impl.1} parent=1 // pred_fallthru
      _
    // Predicated region
    $region54: #{_forward_impl.1} parent=1 // pred_check
      _
    $region55: #{_forward_impl.1} parent=1 // pred_check_branch
      %554 = sbr.rel (0) target = $region57
    $region56: #{_forward_impl.1} parent=1 // pred_region
      %s556 = ssub.s32 64, 64
      %557 = vsyncadd [#allocation12], %s556
      %s559 = sshll.u32 [#allocation11], 4
      %s560 = int_to_ptr.vmem [resolvable:$true] %s559
      %562 = dma.vmem_to_hbm [thread:$0]  %s560, 64, %s9, [#allocation12]
    $region57: #{_forward_impl.1} parent=1 // pred_fallthru
      _
    // Predicated region
    $region58: #{_forward_impl.1} parent=1 // pred_check
      _
    $region59: #{_forward_impl.1} parent=1 // pred_check_branch
      %564 = sbr.rel (0) target = $region61
    $region60: #{_forward_impl.1} parent=1 // pred_region
      %s566 = ssub.s32 64, 64
      %567 = vsyncadd [#allocation12], %s566
      %s569 = sshll.u32 [#allocation13], 4
      %s570 = int_to_ptr.vmem [resolvable:$true] %s569
      %572 = dma.vmem_to_hbm [thread:$0]  %s570, 64, %s10, [#allocation12]
    $region61: #{_forward_impl.1} parent=1 // pred_fallthru
      _
    // Predicated region
    $region62: #{_forward_impl.1} parent=1 // pred_check
      _
    $region63: #{_forward_impl.1} parent=1 // pred_check_branch
      %574 = sbr.rel (0) target = $region65
    $region64: #{_forward_impl.1} parent=1 // pred_region
      %575 = dma.done [#allocation4], 64
    $region65: #{_forward_impl.1} parent=1 // pred_fallthru
      _
    // Predicated region
    $region66: #{_forward_impl.1} parent=1 // pred_check
      _
    $region67: #{_forward_impl.1} parent=1 // pred_check_branch
      %577 = sbr.rel (0) target = $region69
    $region68: #{_forward_impl.1} parent=1 // pred_region
      %578 = dma.done [#allocation12], 64
    $region69: #{_forward_impl.1} parent=1 // pred_fallthru
      _
    // Predicated region
    $region70: #{_forward_impl.1} parent=1 // pred_check
      _
    $region71: #{_forward_impl.1} parent=1 // pred_check_branch
      %580 = sbr.rel (0) target = $region73
    $region72: #{_forward_impl.1} parent=1 // pred_region
      %581 = dma.done [#allocation12], 64
    $region73: #{_forward_impl.1} parent=1 // pred_fallthru
      _
    %582 = vsyncpa [#allocation3], 1
    %583 = vsyncpa [#allocation6], 1
    %584 = vsyncpa [#allocation9], 1
    %585 = vsyncpa [#allocation4], 1
    %586 = vsyncpa [#allocation12], 1

</llo_original>
